<compile_context>
chip_gen: v6e
topology: v6e:2x2x1
jax: 0.10.0
libtpu: 0.0.40
codegen_flags: <defaults>
</compile_context>

<pallas_src>
import functools
import math

import jax
import jax.numpy as jnp
from jax import lax
from jax.experimental import pallas as pl
from jax.experimental.pallas import tpu as pltpu


def _round_up(n, m):
    return ((n + m - 1) // m) * m


# --------------------------------------------------------------------------
# Small-problem path: one grid step, fused projection, unrolled batch loop.
# --------------------------------------------------------------------------
def _fused_small_kernel(xf_ref, wqk_ref, bqk_ref, out_ref, *, batch, seq, qp):
    """xf_ref: (B*T, D) bf16; wqk_ref: (D, 2*Qp) bf16; bqk_ref: (1, 2*Qp) f32;
    out_ref: (B, T, T)."""
    # Single fused projection on the MXU: (B*T, D) @ (D, 2Qp) -> (B*T, 2Qp).
    qk = jnp.dot(xf_ref[...], wqk_ref[...], preferred_element_type=jnp.float32)
    qk = qk + bqk_ref[...]                        # f32 bias add (scale already folded)

    # Lane-tile-aligned split (qp is a multiple of 128).
    q = qk[:, :qp].astype(jnp.bfloat16)
    k = qk[:, qp:].astype(jnp.bfloat16)

    # B tiny scores matmuls, unrolled (B is a static Python int).
    for b in range(batch):
        qb = q[b * seq:(b + 1) * seq, :]
        kb = k[b * seq:(b + 1) * seq, :]
        scores = lax.dot_general(
            qb, kb,
            dimension_numbers=(((1,), (1,)), ((), ())),
            preferred_element_type=jnp.float32,
        )
        out_ref[b] = scores.astype(out_ref.dtype)


def _forward_fused_small(x, wq, bq, wk, bk, out_dtype):
    B, T, D = x.shape
    Q = wq.shape[0]
    qp = _round_up(Q, 128)
    scale = 1.0 / math.sqrt(float(D))

    # One-time packing: fold scale into the Q half, zero-pad each half to qp.
    pad = qp - Q
    wq_p = jnp.pad((wq * scale).T, ((0, 0), (0, pad)))          # (D, qp)
    wk_p = jnp.pad(wk.T, ((0, 0), (0, pad)))                    # (D, qp)
    bq_p = jnp.pad(bq * scale, (0, pad))                        # (qp,)
    bk_p = jnp.pad(bk, (0, pad))                                # (qp,)
    wqk = jnp.concatenate([wq_p, wk_p], axis=-1).astype(jnp.bfloat16)   # (D, 2qp)
    bqk = jnp.concatenate([bq_p, bk_p], axis=-1).reshape(1, 2 * qp).astype(jnp.float32)
    x_flat = x.reshape(B * T, D).astype(jnp.bfloat16)

    kernel = functools.partial(_fused_small_kernel, batch=B, seq=T, qp=qp)

    return pl.pallas_call(
        kernel,
        out_shape=jax.ShapeDtypeStruct((B, T, T), out_dtype),
        grid_spec=pltpu.PrefetchScalarGridSpec(
            num_scalar_prefetch=0,
            grid=(1,),                                   # one grid step total
            in_specs=[
                pl.BlockSpec((B * T, D), lambda i: (0, 0)),
                pl.BlockSpec((D, 2 * qp), lambda i: (0, 0)),
                pl.BlockSpec((1, 2 * qp), lambda i: (0, 0)),
            ],
            out_specs=pl.BlockSpec((B, T, T), lambda i: (0, 0, 0)),
        ),
        compiler_params=pltpu.CompilerParams(
            dimension_semantics=("arbitrary",),
        ),
    )(x_flat, wqk, bqk)


# --------------------------------------------------------------------------
# Production path: query-tiled grid with a resident K scratch per batch.
# --------------------------------------------------------------------------
def _tiled_kernel(x_ref, wq_ref, wk_ref, bq_ref, bk_ref, out_ref, k_scratch, *, tq):
    """x_ref: (T, D) bf16 (full rows for this batch element, resident across qi);
    wq_ref/wk_ref: (D, Qp) bf16; bq_ref/bk_ref: (1, Qp) f32;
    out_ref: (TQ, T); k_scratch: (T, Qp) bf16."""
    qi = pl.program_id(1)

    # Compute the full K projection once per batch element (qi == 0) and keep
    # it resident in VMEM scratch for all query tiles of this batch.
    @pl.when(qi == 0)
    def _():
        kf = jnp.dot(x_ref[...], wk_ref[...], preferred_element_type=jnp.float32)
        k_scratch[...] = (kf + bk_ref[...]).astype(jnp.bfloat16)

    # Project only the current TQ query rows (scale already folded into wq/bq).
    row0 = pl.multiple_of(qi * tq, tq)
    xq = x_ref[pl.ds(row0, tq), :]                                # (TQ, D)
    q = (jnp.dot(xq, wq_ref[...], preferred_element_type=jnp.float32)
         + bq_ref[...]).astype(jnp.bfloat16)                      # (TQ, Qp)

    # Scores for this query tile against all keys: (TQ, Qp) x (T, Qp)^T.
    scores = lax.dot_general(
        q, k_scratch[...],
        dimension_numbers=(((1,), (1,)), ((), ())),
        preferred_element_type=jnp.float32,
    )
    out_ref[...] = scores.astype(out_ref.dtype)                   # lane-dense (last dim T)


def _forward_tiled(x, wq, bq, wk, bk, out_dtype, tq):
    B, T, D = x.shape
    Q = wq.shape[0]
    assert T % tq == 0
    qp = _round_up(Q, 128)
    scale = 1.0 / math.sqrt(float(D))

    pad = qp - Q
    wq_b = jnp.pad((wq * scale).T, ((0, 0), (0, pad))).astype(jnp.bfloat16)  # (D, qp)
    wk_b = jnp.pad(wk.T, ((0, 0), (0, pad))).astype(jnp.bfloat16)            # (D, qp)
    bq_f = jnp.pad(bq * scale, (0, pad)).reshape(1, qp).astype(jnp.float32)
    bk_f = jnp.pad(bk, (0, pad)).reshape(1, qp).astype(jnp.float32)
    x_b = x.astype(jnp.bfloat16)

    kernel = functools.partial(_tiled_kernel, tq=tq)

    return pl.pallas_call(
        kernel,
        out_shape=jax.ShapeDtypeStruct((B, T, T), out_dtype),
        grid_spec=pltpu.PrefetchScalarGridSpec(
            num_scalar_prefetch=0,
            grid=(B, T // tq),
            in_specs=[
                # full rows for batch b; block index constant across qi -> stays
                # resident in VMEM, re-DMA'd only when b changes.
                pl.BlockSpec((None, T, D), lambda b, qi: (b, 0, 0)),
                pl.BlockSpec((D, qp), lambda b, qi: (0, 0)),
                pl.BlockSpec((D, qp), lambda b, qi: (0, 0)),
                pl.BlockSpec((1, qp), lambda b, qi: (0, 0)),
                pl.BlockSpec((1, qp), lambda b, qi: (0, 0)),
            ],
            out_specs=pl.BlockSpec((None, tq, T), lambda b, qi: (b, qi, 0)),
            scratch_shapes=[pltpu.VMEM((T, qp), jnp.bfloat16)],
        ),
        compiler_params=pltpu.CompilerParams(
            # batch sharded across TensorCores on v7x; query axis must be
            # sequential because of the K-scratch hoist at qi == 0.
            dimension_semantics=("parallel", "arbitrary"),
            vmem_limit_bytes=48 * 1024 * 1024,
        ),
    )(x_b, wq_b, wk_b, bq_f, bk_f)


# --------------------------------------------------------------------------
# Public wrapper (mirrors SelfAttention.forward) + pure-JAX reference.
# --------------------------------------------------------------------------
def self_attention_forward(x, wq, bq, wk, bk, *, out_dtype=jnp.float32):
    """x: (B, T, D); wq/wk: (Q, D) nn.Linear layout; bq/bk: (Q,). Returns (B, T, T)."""
    B, T, D = x.shape
    if T >= 256 and T % 128 == 0:
        tq = 256 if T % 256 == 0 else 128
        return _forward_tiled(x, wq, bq, wk, bk, out_dtype, tq)
    return _forward_fused_small(x, wq, bq, wk, bk, out_dtype)


def self_attention_reference(x, wq, bq, wk, bk):
    """Pure-JAX f32 reference matching the PyTorch module exactly."""
    q = jnp.einsum('btd,qd->btq', x, wq) + bq
    k = jnp.einsum('btd,qd->btq', x, wk) + bk
    dot = jnp.einsum('btq,bsq->bts', q, k)
    return dot / jnp.sqrt(jnp.float32(x.shape[-1]))


def _check(name, out, ref, tol):
    err = float(jnp.max(jnp.abs(out - ref)) / (jnp.max(jnp.abs(ref)) + 1e-8))
    assert err < tol, f"{name}: rel-max error {err:.3e} >= {tol}"


if __name__ == "__main__":
    key = jax.random.PRNGKey(0)

    # ---- Demo shapes from the module: SelfAttention(data_dim=16, dim_q=32) ----
    data_dim, dim_q = 16, 32
    B, T = 2, 8
    k1, k2, k3, k4, k5, k6 = jax.random.split(key, 6)
    x = jax.random.normal(k1, (B, T, data_dim), jnp.float32)
    wq = 0.1 * jax.random.normal(k2, (dim_q, data_dim), jnp.float32)
    bq = 0.1 * jax.random.normal(k3, (dim_q,), jnp.float32)
    wk = 0.1 * jax.random.normal(k4, (dim_q, data_dim), jnp.float32)
    bk = 0.1 * jax.random.normal(k5, (dim_q,), jnp.float32)

    out = self_attention_forward(x, wq, bq, wk, bk)
    jax.block_until_ready(out)
    assert out.shape == (B, T, T), f"bad shape {out.shape}"
    # Tolerance reflects bf16 MXU inputs (f32 reference, f32 accumulation).
    _check("fused-small", out, self_attention_reference(x, wq, bq, wk, bk), 5e-2)

    # ---- Sanity-check the query-tiled production path at a modest size ----
    B2, T2, D2, Q2 = 2, 512, 128, 96
    j1, j2, j3, j4, j5 = jax.random.split(k6, 5)
    x2 = jax.random.normal(j1, (B2, T2, D2), jnp.float32)
    s = 1.0 / math.sqrt(float(D2))
    wq2 = s * jax.random.normal(j2, (Q2, D2), jnp.float32)
    bq2 = 0.1 * jax.random.normal(j3, (Q2,), jnp.float32)
    wk2 = s * jax.random.normal(j4, (Q2, D2), jnp.float32)
    bk2 = 0.1 * jax.random.normal(j5, (Q2,), jnp.float32)

    out2 = self_attention_forward(x2, wq2, bq2, wk2, bk2)
    jax.block_until_ready(out2)
    assert out2.shape == (B2, T2, T2), f"bad shape {out2.shape}"
    _check("tiled", out2, self_attention_reference(x2, wq2, bq2, wk2, bk2), 5e-2)

    print("KERNEL_OK")
</pallas_src>

<mosaic_0001>
module attributes {stable_mosaic.version = 11 : i64} {
  func.func @_fused_small_kernel(%arg0: i32, %arg1: memref<16x16xbf16, #tpu.memory_space<vmem>>, %arg2: memref<16x256xbf16, #tpu.memory_space<vmem>>, %arg3: memref<1x256xf32, #tpu.memory_space<vmem>>, %arg4: memref<2x8x8xf32, #tpu.memory_space<vmem>>) attributes {dimension_semantics = [#tpu.dimension_semantics<arbitrary>], iteration_bounds = array<i64: 1>, scalar_prefetch = 0 : i64, scratch_operands = 0 : i64, tpu.core_type = #tpu.core_type<tc>, window_params = [{pipeline_mode = #tpu.pipeline_mode<synchronous>, transform_indices = @transform_0, window_bounds = array<i64: 16, 16>}, {pipeline_mode = #tpu.pipeline_mode<synchronous>, transform_indices = @transform_1, window_bounds = array<i64: 16, 256>}, {pipeline_mode = #tpu.pipeline_mode<synchronous>, transform_indices = @transform_2, window_bounds = array<i64: 1, 256>}, {pipeline_mode = #tpu.pipeline_mode<synchronous>, transform_indices = @transform_3, window_bounds = array<i64: 2, 8, 8>}]} {
    %c0 = arith.constant 0 : index
    %c0_0 = arith.constant 0 : index
    %0 = vector.load %arg1[%c0, %c0_0] : memref<16x16xbf16, #tpu.memory_space<vmem>>, vector<16x16xbf16>
    %c0_1 = arith.constant 0 : index
    %c0_2 = arith.constant 0 : index
    %1 = vector.load %arg2[%c0_1, %c0_2] : memref<16x256xbf16, #tpu.memory_space<vmem>>, vector<16x256xbf16>
    %cst = arith.constant dense<0.000000e+00> : vector<16x256xf32>
    %2 = tpu.matmul %0, %1, %cst {dimension_numbers = #tpu.dot_dimension_numbers<[1], [0], [0], [1], [0, 0, 1, 1], [], []>} : vector<16x16xbf16>, vector<16x256xbf16>, vector<16x256xf32> -> vector<16x256xf32>
    %c0_3 = arith.constant 0 : index
    %c0_4 = arith.constant 0 : index
    %3 = vector.load %arg3[%c0_3, %c0_4] : memref<1x256xf32, #tpu.memory_space<vmem>>, vector<1x256xf32>
    %4 = vector.broadcast %3 : vector<1x256xf32> to vector<16x256xf32>
    %5 = arith.addf %2, %4 : vector<16x256xf32>
    %6 = vector.extract_strided_slice %5 {offsets = [0, 0], sizes = [16, 128], strides = [1, 1]} : vector<16x256xf32> to vector<16x128xf32>
    %7 = arith.truncf %6 : vector<16x128xf32> to vector<16x128xbf16>
    %8 = vector.extract_strided_slice %5 {offsets = [0, 128], sizes = [16, 128], strides = [1, 1]} : vector<16x256xf32> to vector<16x128xf32>
    %9 = arith.truncf %8 : vector<16x128xf32> to vector<16x128xbf16>
    %10 = vector.extract_strided_slice %7 {offsets = [0, 0], sizes = [8, 128], strides = [1, 1]} : vector<16x128xbf16> to vector<8x128xbf16>
    %11 = vector.extract_strided_slice %9 {offsets = [0, 0], sizes = [8, 128], strides = [1, 1]} : vector<16x128xbf16> to vector<8x128xbf16>
    %cst_5 = arith.constant dense<0.000000e+00> : vector<8x8xf32>
    %12 = tpu.matmul %10, %11, %cst_5 {dimension_numbers = #tpu.dot_dimension_numbers<[1], [1], [0], [0], [0, 0, 1, 0], [], []>} : vector<8x128xbf16>, vector<8x128xbf16>, vector<8x8xf32> -> vector<8x8xf32>
    %c0_6 = arith.constant 0 : index
    %c0_7 = arith.constant 0 : index
    %c0_8 = arith.constant 0 : index
    %13 = vector.load %arg4[%c0_6, %c0_7, %c0_8] : memref<2x8x8xf32, #tpu.memory_space<vmem>>, vector<1x8x8xf32>
    %14 = vector.shape_cast %13 : vector<1x8x8xf32> to vector<8x8xf32>
    %15 = vector.shape_cast %12 : vector<8x8xf32> to vector<1x8x8xf32>
    tpu.vector_store %arg4[%c0_6, %c0_7, %c0_8], %15 {strides = array<i32>} : memref<2x8x8xf32, #tpu.memory_space<vmem>>, vector<1x8x8xf32>,
    %16 = vector.extract_strided_slice %7 {offsets = [8, 0], sizes = [8, 128], strides = [1, 1]} : vector<16x128xbf16> to vector<8x128xbf16>
    %17 = vector.extract_strided_slice %9 {offsets = [8, 0], sizes = [8, 128], strides = [1, 1]} : vector<16x128xbf16> to vector<8x128xbf16>
    %cst_9 = arith.constant dense<0.000000e+00> : vector<8x8xf32>
    %18 = tpu.matmul %16, %17, %cst_9 {dimension_numbers = #tpu.dot_dimension_numbers<[1], [1], [0], [0], [0, 0, 1, 0], [], []>} : vector<8x128xbf16>, vector<8x128xbf16>, vector<8x8xf32> -> vector<8x8xf32>
    %c1 = arith.constant 1 : index
    %c0_10 = arith.constant 0 : index
    %c0_11 = arith.constant 0 : index
    %19 = vector.load %arg4[%c1, %c0_10, %c0_11] : memref<2x8x8xf32, #tpu.memory_space<vmem>>, vector<1x8x8xf32>
    %20 = vector.shape_cast %19 : vector<1x8x8xf32> to vector<8x8xf32>
    %21 = vector.shape_cast %18 : vector<8x8xf32> to vector<1x8x8xf32>
    tpu.vector_store %arg4[%c1, %c0_10, %c0_11], %21 {strides = array<i32>} : memref<2x8x8xf32, #tpu.memory_space<vmem>>, vector<1x8x8xf32>,
    return
  }
  func.func @transform_0(%arg0: i32) -> (i32, i32) {
    %c0_i32 = arith.constant 0 : i32
    %c0_i32_0 = arith.constant 0 : i32
    %c0_i32_1 = arith.constant 0 : i32
    return %c0_i32, %c0_i32_0 : i32, i32
  }
  func.func @transform_1(%arg0: i32) -> (i32, i32) {
    %c0_i32 = arith.constant 0 : i32
    %c0_i32_0 = arith.constant 0 : i32
    %c0_i32_1 = arith.constant 0 : i32
    return %c0_i32, %c0_i32_0 : i32, i32
  }
  func.func @transform_2(%arg0: i32) -> (i32, i32) {
    %c0_i32 = arith.constant 0 : i32
    %c0_i32_0 = arith.constant 0 : i32
    %c0_i32_1 = arith.constant 0 : i32
    return %c0_i32, %c0_i32_0 : i32, i32
  }
  func.func @transform_3(%arg0: i32) -> (i32, i32, i32) {
    %c0_i32 = arith.constant 0 : i32
    %c0_i32_0 = arith.constant 0 : i32
    %c0_i32_1 = arith.constant 0 : i32
    %c0_i32_2 = arith.constant 0 : i32
    return %c0_i32, %c0_i32_0, %c0_i32_1 : i32, i32, i32
  }
}

</mosaic_0001>

<llo_original>
// kernel: tpu_custom_call.1
$region0: #{tpu_custom_call.1}
  #allocation0 [shape = 'u32[]', space=smem, size = 0x4, offset = 0x4, fixed_abs, tag = 'smem constant byte address 0x4 - core index']
  #allocation1 [shape = 'u32[144,128]{1,0:T(1,128)}', space=vmem, size = 0x12000, scoped, tag = 'internal scratch']
  %s0 = inlined_call_operand.hbm [shape: bf16[16,16], index: 0, kind: input, shape index: {}]
  %s1 = inlined_call_operand.hbm [shape: bf16[16,256], index: 1, kind: input, shape index: {}]
  %s2 = inlined_call_operand.vmem [shape: f32[1,256], index: 2, kind: input, shape index: {}]
  %s3 = inlined_call_operand.hbm [shape: f32[2,8,8], index: 3, kind: output, shape index: {}]
  %s4 = sld [smem:[#allocation0]]
  $region30: #{tpu_custom_call.1} parent=0
    _
  %s6 = ssub.s32 1, %s4
  %s7 = scalar_select 0, %s6, %s4
  $region1: #{tpu_custom_call.1} parent=0
    #allocation2 [shape = 'u8[4096]{0}', space=vmem, size = 0x1000, scoped, tag = 'input window, operand 0, single buffered']
    #allocation3 [shape = 's32[1]{0}', space=sflag, size = 0x4, scoped, tag = 'scoped memory for tpu_custom_call.1']
    #allocation4 [shape = 's32[1]{0}', space=sflag, size = 0x4, scoped, tag = 'scoped memory for tpu_custom_call.1']
    #allocation5 [shape = 'u8[8192]{0}', space=vmem, size = 0x2000, scoped, tag = 'input window, operand 1, single buffered']
    #allocation6 [shape = 's32[1]{0}', space=sflag, size = 0x4, scoped, tag = 'scoped memory for tpu_custom_call.1']
    #allocation7 [shape = 'u8[8192]{0}', space=vmem, size = 0x2000, scoped, tag = 'output window, operand 0, single buffered']
    %8 = vsyncpa [#allocation3], 0
    %9 = vsyncpa [#allocation6], 0
    %10 = vsyncpa [#allocation4], 0
    // Predicated region
    $region2: #{tpu_custom_call.1} parent=1 // pred_check
      _
    $region3: #{tpu_custom_call.1} parent=1 // pred_check_branch
      %12 = sbr.rel (0) target = $region5
    $region4: #{tpu_custom_call.1} parent=1 // pred_region
      %s14 = ssub.s32 128, 128
      %15 = vsyncadd [#allocation3], %s14
      %s16 = sshll.u32 [#allocation2], 4
      %s17 = int_to_ptr.vmem [resolvable:$true] %s16
      %22 = dma.hbm_to_vmem [thread:$0]  %s0, 128, %s17, [#allocation3], 64, 64, 4
    $region5: #{tpu_custom_call.1} parent=1 // pred_fallthru
      _
    // Predicated region
    $region6: #{tpu_custom_call.1} parent=1 // pred_check
      _
    $region7: #{tpu_custom_call.1} parent=1 // pred_check_branch
      %24 = sbr.rel (0) target = $region9
    $region8: #{tpu_custom_call.1} parent=1 // pred_region
      %s26 = ssub.s32 256, 256
      %27 = vsyncadd [#allocation6], %s26
      %s28 = sshll.u32 [#allocation5], 4
      %s29 = int_to_ptr.vmem [resolvable:$true] %s28
      %34 = dma.hbm_to_vmem [thread:$0]  %s1, 256, %s29, [#allocation6], 128, 128, 8
    $region9: #{tpu_custom_call.1} parent=1 // pred_fallthru
      _
    // Predicated region
    $region10: #{tpu_custom_call.1} parent=1 // pred_check
      _
    $region11: #{tpu_custom_call.1} parent=1 // pred_check_branch
      %36 = sbr.rel (0) target = $region13
    $region12: #{tpu_custom_call.1} parent=1 // pred_region
      _
    $region13: #{tpu_custom_call.1} parent=1 // pred_fallthru
      _
    // Predicated region
    $region14: #{tpu_custom_call.1} parent=1 // pred_check
      _
    $region15: #{tpu_custom_call.1} parent=1 // pred_check_branch
      %38 = sbr.rel (0) target = $region17
    $region16: #{tpu_custom_call.1} parent=1 // pred_region
      %39 = dma.done [#allocation3], 128
    $region17: #{tpu_custom_call.1} parent=1 // pred_fallthru
      _
    // Predicated region
    $region18: #{tpu_custom_call.1} parent=1 // pred_check
      _
    $region19: #{tpu_custom_call.1} parent=1 // pred_check_branch
      %41 = sbr.rel (0) target = $region21
    $region20: #{tpu_custom_call.1} parent=1 // pred_region
      %42 = dma.done [#allocation6], 256
    $region21: #{tpu_custom_call.1} parent=1 // pred_fallthru
      _
    %v44 = vld [vmem:[#allocation2] sm:$0xf]
    %v45 = vld [vmem:[#allocation2 + $0x4] sm:$0xf]
    %v46 = vld [vmem:[#allocation5] sm:$0xff]
    %v47 = vld [vmem:[#allocation5 + $0x8] sm:$0xff]
    %v48 = vld [vmem:[%s2] sm:$0x3]
    %v50 = vlaneseq
    %v51 = vshrl.u32 %v50, 7
    %v52 = vsub.s32 0, %v51
    %v53 = vrot.slane %v48, %v52
    %v54 = vlaneseq
    %v55 = vshrl.u32 %v54, 7
    %v56 = vsub.s32 1, %v55
    %v57 = vrot.slane %v48, %v56
    %v62 = vunpack.c.l.b16 %v44
    %v63 = vunpack.c.l.b16 %v45
    %v64 = vpack.c.b16 %v63, %v62
    %v67 = vunpack.c.l.b16 %v46
    %v68 = vunpack.c.h.b16 %v46
    %v69 = vunpack.c.l.b16 %v47
    %v70 = vunpack.c.h.b16 %v47
    %v71 = vpack.c.b16 %v69, %v67
    %v72 = vpack.c.b16 %v70, %v68
    %vm75 = vcmask 130048
    %v77 = vsel %vm75, %v64, 0
    %79 = vmatprep.subr.bf16.mxu0 0
    %80 = vmatpush1.bf16.msra.mxu0 0
    %81 = vmatprep.subr.bf16.mxu0 0
    %82 = vmatpush1.bf16.msra.mxu0 0
    %83 = vmatprep.subr.bf16.mxu0 0
    %84 = vmatpush1.bf16.msra.mxu0 0
    %85 = vmatprep.subr.bf16.mxu0 0
    %86 = vmatpush1.bf16.msra.mxu0 0
    %87 = vmatprep.subr.bf16.mxu0 0
    %88 = vmatpush1.bf16.msra.mxu0 0
    %89 = vmatprep.subr.bf16.mxu0 0
    %90 = vmatpush1.bf16.msra.mxu0 0
    %91 = vmatprep.subr.bf16.mxu0 0
    %92 = vmatpush1.bf16.msra.mxu0 0
    %93 = vmatprep.subr.bf16.mxu0 %v72
    %94 = vmatpush1.bf16.msra.mxu0 %v71
    %95 = vmatprep.subr.bf16.mxu0 0
    %96 = vmatpush2.bf16.msra.mxu0 0
    %97 = vmatprep.subr.bf16.mxu0 0
    %98 = vmatpush2.bf16.msra.mxu0 0
    %99 = vmatprep.subr.bf16.mxu0 0
    %100 = vmatpush2.bf16.msra.mxu0 0
    %101 = vmatprep.subr.bf16.mxu0 0
    %102 = vmatpush2.bf16.msra.mxu0 0
    %103 = vmatprep.subr.bf16.mxu0 0
    %104 = vmatpush2.bf16.msra.mxu0 0
    %105 = vmatprep.subr.bf16.mxu0 0
    %106 = vmatpush2.bf16.msra.mxu0 0
    %107 = vmatprep.subr.bf16.mxu0 0
    %108 = vmatpush2.bf16.msra.mxu0 0
    %109 = vmatprep.subr.bf16.mxu0 0
    %110 = vmatpush2.bf16.msra.mxu0 0
    %111 = vmatprep.mubr.bf16.mxu0 0
    %112 = vmatmul.mubr.bf16.gmra.mxu0 %v77
    %v113 = vpop.f32.mrf.mxu0
    %v114 = vadd.f32 %v53, %v113
    %v115 = vpop.f32.mrf.mxu0
    %v116 = vadd.f32 %v57, %v115
    %v117 = vpop.f32.mrf.mxu0
    %v118 = vadd.f32 %v53, %v117
    %v119 = vpop.f32.mrf.mxu0
    %v120 = vadd.f32 %v57, %v119
    %121 = vdwg.mxu0
    %v122 = vpack.c.bf16 %v118, %v114
    %v123 = vpack.c.bf16 %v120, %v116
    %124 = vmatprep.subr.bf16.mxu0 0
    %125 = vmatpush1.bf16.xpose.msra.mxu0 0
    %126 = vmatprep.subr.bf16.mxu0 0
    %127 = vmatpush1.bf16.xpose.msra.mxu0 0
    %128 = vmatprep.subr.bf16.mxu0 0
    %129 = vmatpush1.bf16.xpose.msra.mxu0 0
    %130 = vmatprep.subr.bf16.mxu0 0
    %131 = vmatpush1.bf16.xpose.msra.mxu0 0
    %132 = vmatprep.subr.bf16.mxu0 0
    %133 = vmatpush1.bf16.xpose.msra.mxu0 0
    %134 = vmatprep.subr.bf16.mxu0 0
    %135 = vmatpush1.bf16.xpose.msra.mxu0 0
    %136 = vmatprep.subr.bf16.mxu0 0
    %137 = vmatpush1.bf16.xpose.msra.mxu0 0
    %138 = vmatprep.subr.bf16.mxu0 0
    %139 = vmatpush1.bf16.xpose.msra.mxu0 %v123
    %140 = vmatprep.subr.bf16.mxu0 0
    %141 = vmatpush2.bf16.xpose.msra.mxu0 0
    %142 = vmatprep.subr.bf16.mxu0 0
    %143 = vmatpush2.bf16.xpose.msra.mxu0 0
    %144 = vmatprep.subr.bf16.mxu0 0
    %145 = vmatpush2.bf16.xpose.msra.mxu0 0
    %146 = vmatprep.subr.bf16.mxu0 0
    %147 = vmatpush2.bf16.xpose.msra.mxu0 0
    %148 = vmatprep.subr.bf16.mxu0 0
    %149 = vmatpush2.bf16.xpose.msra.mxu0 0
    %150 = vmatprep.subr.bf16.mxu0 0
    %151 = vmatpush2.bf16.xpose.msra.mxu0 0
    %152 = vmatprep.subr.bf16.mxu0 0
    %153 = vmatpush2.bf16.xpose.msra.mxu0 0
    %154 = vmatprep.subr.bf16.mxu0 0
    %155 = vmatpush2.bf16.xpose.msra.mxu0 0
    %156 = vmatprep.mubr.bf16.mxu0 0
    %157 = vmatmul.mubr.bf16.gmra.mxu0 %v122
    %v158 = vpop.f32.mrf.mxu0
    %v159 = vadd.f32 0.0, %v158
    %v160 = vpop.f32.mrf.mxu0
    %v161 = vpop.f32.mrf.mxu0
    %v162 = vpop.f32.mrf.mxu0
    %163 = vdwg.mxu0
    %vm164 = vcmask 64512
    %165 = vst.msk [vmem:[#allocation7] sm:$0xff] %vm164, %v159
    %v167 = vrot.slane %v122, 4
    %v170 = vrot.slane %v123, 4
    %172 = vmatprep.subr.bf16.mxu0 0
    %173 = vmatpush1.bf16.xpose.msra.mxu0 0
    %174 = vmatprep.subr.bf16.mxu0 0
    %175 = vmatpush1.bf16.xpose.msra.mxu0 0
    %176 = vmatprep.subr.bf16.mxu0 0
    %177 = vmatpush1.bf16.xpose.msra.mxu0 0
    %178 = vmatprep.subr.bf16.mxu0 0
    %179 = vmatpush1.bf16.xpose.msra.mxu0 0
    %180 = vmatprep.subr.bf16.mxu0 0
    %181 = vmatpush1.bf16.xpose.msra.mxu0 0
    %182 = vmatprep.subr.bf16.mxu0 0
    %183 = vmatpush1.bf16.xpose.msra.mxu0 0
    %184 = vmatprep.subr.bf16.mxu0 0
    %185 = vmatpush1.bf16.xpose.msra.mxu0 0
    %186 = vmatprep.subr.bf16.mxu0 0
    %187 = vmatpush1.bf16.xpose.msra.mxu0 %v170
    %188 = vmatprep.subr.bf16.mxu0 0
    %189 = vmatpush2.bf16.xpose.msra.mxu0 0
    %190 = vmatprep.subr.bf16.mxu0 0
    %191 = vmatpush2.bf16.xpose.msra.mxu0 0
    %192 = vmatprep.subr.bf16.mxu0 0
    %193 = vmatpush2.bf16.xpose.msra.mxu0 0
    %194 = vmatprep.subr.bf16.mxu0 0
    %195 = vmatpush2.bf16.xpose.msra.mxu0 0
    %196 = vmatprep.subr.bf16.mxu0 0
    %197 = vmatpush2.bf16.xpose.msra.mxu0 0
    %198 = vmatprep.subr.bf16.mxu0 0
    %199 = vmatpush2.bf16.xpose.msra.mxu0 0
    %200 = vmatprep.subr.bf16.mxu0 0
    %201 = vmatpush2.bf16.xpose.msra.mxu0 0
    %202 = vmatprep.subr.bf16.mxu0 0
    %203 = vmatpush2.bf16.xpose.msra.mxu0 0
    %204 = vmatprep.mubr.bf16.mxu0 0
    %205 = vmatmul.mubr.bf16.gmra.mxu0 %v167
    %v206 = vpop.f32.mrf.mxu0
    %v207 = vadd.f32 0.0, %v206
    %v208 = vpop.f32.mrf.mxu0
    %v209 = vpop.f32.mrf.mxu0
    %v210 = vpop.f32.mrf.mxu0
    %211 = vdwg.mxu0
    %s212 = scalar_lea.vmem [#allocation7], 8
    %213 = vst.msk [vmem:[%s212] sm:$0xff] %vm164, %v207
    // Predicated region
    $region22: #{tpu_custom_call.1} parent=1 // pred_check
      _
    $region23: #{tpu_custom_call.1} parent=1 // pred_check_branch
      %215 = sbr.rel (0) target = $region25
    $region24: #{tpu_custom_call.1} parent=1 // pred_region
      %s217 = ssub.s32 256, 256
      %218 = vsyncadd [#allocation4], %s217
      %s219 = sshll.u32 [#allocation7], 4
      %s220 = int_to_ptr.vmem [resolvable:$true] %s219
      %225 = dma.vmem_to_hbm [thread:$0]  %s220, 256, %s3, [#allocation4], 128, 128, 8
    $region25: #{tpu_custom_call.1} parent=1 // pred_fallthru
      _
    // Predicated region
    $region26: #{tpu_custom_call.1} parent=1 // pred_check
      _
    $region27: #{tpu_custom_call.1} parent=1 // pred_check_branch
      %227 = sbr.rel (0) target = $region29
    $region28: #{tpu_custom_call.1} parent=1 // pred_region
      %228 = dma.done [#allocation4], 256
    $region29: #{tpu_custom_call.1} parent=1 // pred_fallthru
      _
    %229 = vsyncpa [#allocation3], 1
    %230 = vsyncpa [#allocation6], 1
    %231 = vsyncpa [#allocation4], 1

</llo_original>
